<compile_context>
chip_gen: v5e
topology: v5e:2x2
jax: 0.10.0
libtpu: 0.0.40
codegen_flags: <defaults>
</compile_context>

<pallas_src>
import functools

import jax
import jax.numpy as jnp
from jax.experimental import pallas as pl
from jax.experimental.pallas import tpu as pltpu


def _vmem_capacity_bytes():
    """Physical VMEM per TensorCore; conservative fallback if the query fails."""
    try:
        cap = int(pltpu.get_tpu_info().vmem_capacity_bytes)
        if cap > 0:
            return cap
    except Exception:
        pass
    return 64 << 20  # v7x-sized fallback; safe on every generation.


def channel_attention_kernel(x_ref, w1_ref, w2_ref, o_ref, sum_acc, max_acc, *,
                             inv_n, f_total, hw_total, mask_f, mask_hw):
    # x_ref  : (1, tf, C, thw)  tf frames x thw spatial lanes of one batch element
    # w1_ref : (Hd, C)   Conv3d(C -> Hd) weight (trailing 1x1x1 squeezed)
    # w2_ref : (C, Hd)   Conv3d(Hd -> C) weight
    # o_ref  : (1, C, 1)
    # sum_acc: (C, thw) f32 VMEM scratch   (lane-wise running sum)
    # max_acc: (C, thw) x-dtype VMEM scratch (lane-wise running max)
    f_blk = pl.program_id(1)
    hw_blk = pl.program_id(2)
    nf = pl.num_programs(1)
    nhw = pl.num_programs(2)

    @pl.when((f_blk == 0) & (hw_blk == 0))
    def _init():
        sum_acc[...] = jnp.zeros_like(sum_acc)
        max_acc[...] = jnp.full_like(max_acc, -jnp.inf)

    x = x_ref[0]                                   # (tf, C, thw), native dtype
    tf, _, thw = x.shape

    if mask_f or mask_hw:
        # Ragged tail block: mask out-of-range frames / spatial positions.
        valid = None
        if mask_f:
            fidx = jax.lax.broadcasted_iota(jnp.int32, (tf, 1, thw), 0) + f_blk * tf
            valid = fidx < f_total
        if mask_hw:
            hidx = jax.lax.broadcasted_iota(jnp.int32, (tf, 1, thw), 2) + hw_blk * thw
            hmask = hidx < hw_total
            valid = hmask if valid is None else (valid & hmask)
        x_sum = jnp.where(valid, x, jnp.zeros((), x.dtype))
        x_max = jnp.where(valid, x, jnp.full((), -jnp.inf, x.dtype))
    else:
        x_sum = x
        x_max = x

    # Lane-wise accumulate (pure VPU vadd/vmax over the tf slabs); the cross-lane
    # (XLU) reduce is deferred to the finalize step.
    sum_acc[...] += jnp.sum(x_sum.astype(jnp.float32), axis=0)                 # (C, thw)
    max_acc[...] = jnp.maximum(max_acc[...], jnp.max(x_max, axis=0))           # (C, thw)

    @pl.when((f_blk == nf - 1) & (hw_blk == nhw - 1))
    def _finalize():
        avg = jnp.sum(sum_acc[...], axis=-1, keepdims=True) * jnp.float32(inv_n)   # (C, 1)
        mx = jnp.max(max_acc[...], axis=-1, keepdims=True).astype(jnp.float32)     # (C, 1)
        pooled = jnp.concatenate([avg, mx], axis=-1)                               # (C, 2)
        # Fused shared MLP on both pooled vectors at once.
        h = jnp.dot(w1_ref[...], pooled,
                    preferred_element_type=jnp.float32)                            # (Hd, 2)
        h = jnp.maximum(h, 0.0)                                                    # ReLU
        y = jnp.dot(w2_ref[...], h,
                    preferred_element_type=jnp.float32)                            # (C, 2)
        out = jax.nn.sigmoid(y[:, 0:1] + y[:, 1:2])                                # (C, 1)
        o_ref[0] = out.astype(o_ref.dtype)


def channel_attention(x, w1, w2, *, block_budget_bytes=None):
    """x: (B, F, C, H, W).  w1: (C//r, C), w2: (C, C//r) (PyTorch Conv3d weight shapes
    with the trailing 1x1x1 squeezed).  Returns (B, 1, C, 1, 1) float32."""
    B, F, C, H, W = x.shape
    HW = H * W
    N = F * HW
    hidden = w1.shape[0]
    itemsize = x.dtype.itemsize

    # Free reshape (no data movement): b f c h w -> b f c (h w).
    x4 = x.reshape(B, F, C, HW)

    vmem_cap = _vmem_capacity_bytes()
    if block_budget_bytes is None:
        # ~8 MiB x-blocks on v7x (64 MiB VMEM/TC), ~16 MiB on v5e/v6e (128 MiB/TC).
        block_budget_bytes = max(1 << 20, vmem_cap // 8)

    # --- tile selection (tf frames x thw spatial lanes); no divisibility required ---
    frame_bytes = C * HW * itemsize
    if frame_bytes <= block_budget_bytes:
        thw = HW
        tf = int(max(1, min(F, block_budget_bytes // frame_bytes)))
    else:
        # A single frame is too large: keep one frame per block and tile H*W in
        # 128-lane multiples (satisfies the (8,128) constraint); tail is masked.
        tf = 1
        thw = int(max(128, (block_budget_bytes // (C * itemsize)) // 128 * 128))
        thw = min(thw, HW)
        if thw < HW:
            thw = max(128, (thw // 128) * 128)

    nf = pl.cdiv(F, tf)
    nhw = pl.cdiv(HW, thw)
    grid = (B, nf, nhw)

    # --- VMEM budget from the real working set ---
    block_bytes = tf * C * thw * itemsize
    acc_bytes = C * thw * (4 + itemsize)                       # f32 sum + native max
    weight_bytes = 2 * (w1.size * w1.dtype.itemsize + w2.size * w2.dtype.itemsize)
    out_bytes = 2 * C * 4
    need = 2 * block_bytes + acc_bytes + weight_bytes + out_bytes + (2 << 20)
    vmem_limit = int(min(max(need, 8 << 20), int(vmem_cap * 0.9)))

    # Deeper buffering only pays when blocks are tiny and there is something to pipeline.
    x_pipeline_mode = None
    if block_bytes < (512 << 10) and nf * nhw >= 4:
        x_pipeline_mode = pl.Buffered(3)
    x_spec = pl.BlockSpec((1, tf, C, thw), lambda b, f, hw: (b, f, 0, hw),
                          **({} if x_pipeline_mode is None
                             else {"pipeline_mode": x_pipeline_mode}))

    kernel = functools.partial(
        channel_attention_kernel,
        inv_n=1.0 / float(N),
        f_total=F,
        hw_total=HW,
        mask_f=(F % tf != 0),
        mask_hw=(HW % thw != 0),
    )

    out = pl.pallas_call(
        kernel,
        out_shape=jax.ShapeDtypeStruct((B, C, 1), jnp.float32),
        grid_spec=pltpu.PrefetchScalarGridSpec(
            num_scalar_prefetch=0,
            grid=grid,
            in_specs=[
                x_spec,
                pl.BlockSpec((hidden, C), lambda b, f, hw: (0, 0)),
                pl.BlockSpec((C, hidden), lambda b, f, hw: (0, 0)),
            ],
            out_specs=pl.BlockSpec((1, C, 1), lambda b, f, hw: (b, 0, 0)),
            scratch_shapes=[
                pltpu.VMEM((C, thw), jnp.float32),   # lane-wise running sum
                pltpu.VMEM((C, thw), x.dtype),       # lane-wise running max (exact in native dtype)
            ],
        ),
        compiler_params=pltpu.CompilerParams(
            dimension_semantics=("parallel", "arbitrary", "arbitrary"),
            vmem_limit_bytes=vmem_limit,
        ),
    )(x4, w1, w2)

    # (B, C, 1) -> (b, 1, c, 1, 1): matches rearrange('b c f h w -> b f c h w') applied
    # to the pooled (b, c, 1, 1, 1) attention map.
    return out.reshape(B, 1, C, 1, 1)


def channel_attention_ref(x, w1, w2):
    """Pure-JAX reference mirroring the PyTorch module."""
    xc = jnp.transpose(x, (0, 2, 1, 3, 4))          # (B, C, F, H, W)
    avg = jnp.mean(xc, axis=(2, 3, 4))              # (B, C)
    mx = jnp.max(xc, axis=(2, 3, 4))                # (B, C)

    def mlp(v):
        h = jnp.maximum(v @ w1.T, 0.0)
        return h @ w2.T

    out = jax.nn.sigmoid(mlp(avg) + mlp(mx))        # (B, C)
    B, C = out.shape
    return out.reshape(B, 1, C, 1, 1)


if __name__ == "__main__":
    key = jax.random.PRNGKey(0)
    B, F, C, H, W = 2, 8, 32, 16, 16
    ratio = 4                      # in_planes=32, ratio=4 -> hidden=8
    hidden = C // ratio

    kx, k1, k2 = jax.random.split(key, 3)
    x = jax.random.normal(kx, (B, F, C, H, W), dtype=jnp.float32)
    # Deterministic synthetic weights in PyTorch Conv3d shapes (out, in), 1x1x1 squeezed.
    w1 = jax.random.normal(k1, (hidden, C), dtype=jnp.float32) * 0.1
    w2 = jax.random.normal(k2, (C, hidden), dtype=jnp.float32) * 0.1

    out = jax.block_until_ready(channel_attention(x, w1, w2))
    ref = jax.block_until_ready(channel_attention_ref(x, w1, w2))

    assert out.shape == (B, 1, C, 1, 1), out.shape
    assert jnp.allclose(out, ref, atol=1e-5, rtol=1e-5), \
        f"max err {jnp.max(jnp.abs(out - ref))}"
    print("KERNEL_OK")
</pallas_src>

<mosaic_0001>
module attributes {stable_mosaic.version = 11 : i64} {
  func.func @channel_attention_kernel(%arg0: i32, %arg1: i32, %arg2: i32, %arg3: memref<1x8x32x256xf32, #tpu.memory_space<vmem>>, %arg4: memref<8x32xf32, #tpu.memory_space<vmem>>, %arg5: memref<32x8xf32, #tpu.memory_space<vmem>>, %arg6: memref<1x32x1xf32, #tpu.memory_space<vmem>>, %arg7: memref<32x256xf32, #tpu.memory_space<vmem>>, %arg8: memref<32x256xf32, #tpu.memory_space<vmem>>) attributes {dimension_semantics = [#tpu.dimension_semantics<parallel>, #tpu.dimension_semantics<arbitrary>, #tpu.dimension_semantics<arbitrary>], iteration_bounds = array<i64: 2, 1, 1>, scalar_prefetch = 0 : i64, scratch_operands = 2 : i64, tpu.core_type = #tpu.core_type<tc>, window_params = [{transform_indices = @transform_0, window_bounds = array<i64: 1, 8, 32, 256>}, {pipeline_mode = #tpu.pipeline_mode<synchronous>, transform_indices = @transform_1, window_bounds = array<i64: 8, 32>}, {pipeline_mode = #tpu.pipeline_mode<synchronous>, transform_indices = @transform_2, window_bounds = array<i64: 32, 8>}, {transform_indices = @transform_3, window_bounds = array<i64: 1, 32, 1>}]} {
    %c0_i32 = arith.constant 0 : i32
    %0 = arith.cmpi eq, %arg1, %c0_i32 : i32
    %c0_i32_0 = arith.constant 0 : i32
    %1 = arith.cmpi eq, %arg2, %c0_i32_0 : i32
    %2 = arith.andi %0, %1 : i1
    %3 = arith.extui %2 : i1 to i32
    %c0_i32_1 = arith.constant 0 : i32
    %4 = arith.cmpi ne, %3, %c0_i32_1 : i32
    scf.if %4 {
      %cst_17 = arith.constant 0.000000e+00 : f32
      %20 = vector.broadcast %cst_17 : f32 to vector<32x256xf32>
      %c0_18 = arith.constant 0 : index
      %c0_19 = arith.constant 0 : index
      %21 = vector.load %arg7[%c0_18, %c0_19] : memref<32x256xf32, #tpu.memory_space<vmem>>, vector<32x256xf32>
      tpu.vector_store %arg7[%c0_18, %c0_19], %20 {strides = array<i32>} : memref<32x256xf32, #tpu.memory_space<vmem>>, vector<32x256xf32>,
      %cst_20 = arith.constant 0xFF800000 : f32
      %22 = vector.broadcast %cst_20 : f32 to vector<32x256xf32>
      %c0_21 = arith.constant 0 : index
      %c0_22 = arith.constant 0 : index
      %23 = vector.load %arg8[%c0_21, %c0_22] : memref<32x256xf32, #tpu.memory_space<vmem>>, vector<32x256xf32>
      tpu.vector_store %arg8[%c0_21, %c0_22], %22 {strides = array<i32>} : memref<32x256xf32, #tpu.memory_space<vmem>>, vector<32x256xf32>,
    } else {
    }
    %c0 = arith.constant 0 : index
    %c0_2 = arith.constant 0 : index
    %c0_3 = arith.constant 0 : index
    %c0_4 = arith.constant 0 : index
    %5 = vector.load %arg3[%c0, %c0_2, %c0_3, %c0_4] : memref<1x8x32x256xf32, #tpu.memory_space<vmem>>, vector<1x8x32x256xf32>
    %6 = vector.shape_cast %5 : vector<1x8x32x256xf32> to vector<8x32x256xf32>
    %c0_5 = arith.constant 0 : index
    %c0_6 = arith.constant 0 : index
    %7 = vector.load %arg7[%c0_5, %c0_6] : memref<32x256xf32, #tpu.memory_space<vmem>>, vector<32x256xf32>
    %cst = arith.constant dense<0.000000e+00> : vector<32x256xf32>
    %8 = vector.multi_reduction <add>, %6, %cst [0] : vector<8x32x256xf32> to vector<32x256xf32>
    %9 = arith.addf %7, %8 : vector<32x256xf32>
    %c0_7 = arith.constant 0 : index
    %c0_8 = arith.constant 0 : index
    %10 = vector.load %arg7[%c0_7, %c0_8] : memref<32x256xf32, #tpu.memory_space<vmem>>, vector<32x256xf32>
    tpu.vector_store %arg7[%c0_7, %c0_8], %9 {strides = array<i32>} : memref<32x256xf32, #tpu.memory_space<vmem>>, vector<32x256xf32>,
    %c0_9 = arith.constant 0 : index
    %c0_10 = arith.constant 0 : index
    %11 = vector.load %arg8[%c0_9, %c0_10] : memref<32x256xf32, #tpu.memory_space<vmem>>, vector<32x256xf32>
    %cst_11 = arith.constant dense<0xFF800000> : vector<32x256xf32>
    %12 = vector.multi_reduction <maximumf>, %6, %cst_11 [0] : vector<8x32x256xf32> to vector<32x256xf32>
    %13 = arith.maximumf %11, %12 : vector<32x256xf32>
    %c0_12 = arith.constant 0 : index
    %c0_13 = arith.constant 0 : index
    %14 = vector.load %arg8[%c0_12, %c0_13] : memref<32x256xf32, #tpu.memory_space<vmem>>, vector<32x256xf32>
    tpu.vector_store %arg8[%c0_12, %c0_13], %13 {strides = array<i32>} : memref<32x256xf32, #tpu.memory_space<vmem>>, vector<32x256xf32>,
    %c0_i32_14 = arith.constant 0 : i32
    %15 = arith.cmpi eq, %arg1, %c0_i32_14 : i32
    %c0_i32_15 = arith.constant 0 : i32
    %16 = arith.cmpi eq, %arg2, %c0_i32_15 : i32
    %17 = arith.andi %15, %16 : i1
    %18 = arith.extui %17 : i1 to i32
    %c0_i32_16 = arith.constant 0 : i32
    %19 = arith.cmpi ne, %18, %c0_i32_16 : i32
    scf.if %19 {
      %c0_17 = arith.constant 0 : index
      %c0_18 = arith.constant 0 : index
      %20 = vector.load %arg7[%c0_17, %c0_18] : memref<32x256xf32, #tpu.memory_space<vmem>>, vector<32x256xf32>
      %cst_19 = arith.constant dense<0.000000e+00> : vector<32xf32>
      %21 = vector.multi_reduction <add>, %20, %cst_19 [1] : vector<32x256xf32> to vector<32xf32>
      %22 = vector.shape_cast %21 : vector<32xf32> to vector<32x1xf32>
      %cst_20 = arith.constant 4.8828125E-4 : f32
      %23 = vector.broadcast %cst_20 : f32 to vector<32x1xf32>
      %24 = arith.mulf %22, %23 : vector<32x1xf32>
      %c0_21 = arith.constant 0 : index
      %c0_22 = arith.constant 0 : index
      %25 = vector.load %arg8[%c0_21, %c0_22] : memref<32x256xf32, #tpu.memory_space<vmem>>, vector<32x256xf32>
      %cst_23 = arith.constant dense<0xFF800000> : vector<32xf32>
      %26 = vector.multi_reduction <maximumf>, %25, %cst_23 [1] : vector<32x256xf32> to vector<32xf32>
      %27 = vector.shape_cast %26 : vector<32xf32> to vector<32x1xf32>
      %28 = tpu.concatenate %24, %27 in 1 : vector<32x1xf32>, vector<32x1xf32> -> vector<32x2xf32>
      %c0_24 = arith.constant 0 : index
      %c0_25 = arith.constant 0 : index
      %29 = vector.load %arg4[%c0_24, %c0_25] : memref<8x32xf32, #tpu.memory_space<vmem>>, vector<8x32xf32>
      %cst_26 = arith.constant dense<0.000000e+00> : vector<8x2xf32>
      %30 = tpu.matmul %29, %28, %cst_26 {dimension_numbers = #tpu.dot_dimension_numbers<[1], [0], [0], [1], [0, 0, 1, 1], [], []>} : vector<8x32xf32>, vector<32x2xf32>, vector<8x2xf32> -> vector<8x2xf32>
      %cst_27 = arith.constant 0.000000e+00 : f32
      %31 = vector.broadcast %cst_27 : f32 to vector<8x2xf32>
      %32 = arith.maximumf %30, %31 : vector<8x2xf32>
      %c0_28 = arith.constant 0 : index
      %c0_29 = arith.constant 0 : index
      %33 = vector.load %arg5[%c0_28, %c0_29] : memref<32x8xf32, #tpu.memory_space<vmem>>, vector<32x8xf32>
      %cst_30 = arith.constant dense<0.000000e+00> : vector<32x2xf32>
      %34 = tpu.matmul %33, %32, %cst_30 {dimension_numbers = #tpu.dot_dimension_numbers<[1], [0], [0], [1], [0, 0, 1, 1], [], []>} : vector<32x8xf32>, vector<8x2xf32>, vector<32x2xf32> -> vector<32x2xf32>
      %35 = vector.extract_strided_slice %34 {offsets = [0, 0], sizes = [32, 1], strides = [1, 1]} : vector<32x2xf32> to vector<32x1xf32>
      %36 = vector.extract_strided_slice %34 {offsets = [0, 1], sizes = [32, 1], strides = [1, 1]} : vector<32x2xf32> to vector<32x1xf32>
      %37 = arith.addf %35, %36 : vector<32x1xf32>
      %38 = arith.negf %37 : vector<32x1xf32>
      %39 = math.exp %38 : vector<32x1xf32>
      %cst_31 = arith.constant 1.000000e+00 : f32
      %40 = vector.broadcast %cst_31 : f32 to vector<32x1xf32>
      %41 = arith.addf %40, %39 : vector<32x1xf32>
      %42 = arith.divf %40, %41 : vector<32x1xf32>
      %c0_32 = arith.constant 0 : index
      %c0_33 = arith.constant 0 : index
      %c0_34 = arith.constant 0 : index
      %43 = vector.load %arg6[%c0_32, %c0_33, %c0_34] : memref<1x32x1xf32, #tpu.memory_space<vmem>>, vector<1x32x1xf32>
      %44 = vector.shape_cast %43 : vector<1x32x1xf32> to vector<32x1xf32>
      %45 = vector.shape_cast %42 : vector<32x1xf32> to vector<1x32x1xf32>
      tpu.vector_store %arg6[%c0_32, %c0_33, %c0_34], %45 {strides = array<i32>} : memref<1x32x1xf32, #tpu.memory_space<vmem>>, vector<1x32x1xf32>,
    } else {
    }
    return
  }
  func.func @transform_0(%arg0: i32, %arg1: i32, %arg2: i32) -> (i32, i32, i32, i32) {
    %c0_i32 = arith.constant 0 : i32
    %c0_i32_0 = arith.constant 0 : i32
    return %arg0, %arg1, %c0_i32, %arg2 : i32, i32, i32, i32
  }
  func.func @transform_1(%arg0: i32, %arg1: i32, %arg2: i32) -> (i32, i32) {
    %c0_i32 = arith.constant 0 : i32
    %c0_i32_0 = arith.constant 0 : i32
    %c0_i32_1 = arith.constant 0 : i32
    return %c0_i32, %c0_i32_0 : i32, i32
  }
  func.func @transform_2(%arg0: i32, %arg1: i32, %arg2: i32) -> (i32, i32) {
    %c0_i32 = arith.constant 0 : i32
    %c0_i32_0 = arith.constant 0 : i32
    %c0_i32_1 = arith.constant 0 : i32
    return %c0_i32, %c0_i32_0 : i32, i32
  }
  func.func @transform_3(%arg0: i32, %arg1: i32, %arg2: i32) -> (i32, i32, i32) {
    %c0_i32 = arith.constant 0 : i32
    %c0_i32_0 = arith.constant 0 : i32
    %c0_i32_1 = arith.constant 0 : i32
    return %arg0, %c0_i32, %c0_i32_0 : i32, i32, i32
  }
}

</mosaic_0001>

<llo_original>
// kernel: tpu_custom_call.1
$region0: #{tpu_custom_call.1}
  #allocation0 [shape = 'u32[]', space=smem, size = 0x4, offset = 0x4, fixed_abs, tag = 'smem constant byte address 0x4 - core index']
  #allocation1 [shape = 'u32[72,128]{1,0:T(1,128)}', space=vmem, size = 0x9000, scoped, tag = 'internal scratch']
  #allocation2 [shape = 'f32[32,256]{1,0:T(8,128)}', space=vmem, size = 0x8000, scoped, tag = 'scratch operand']
  #allocation3 [shape = 'f32[32,256]{1,0:T(8,128)}', space=vmem, size = 0x8000, scoped, tag = 'scratch operand']
  %s0 = inlined_call_operand.hbm [shape: f32[2,8,32,256], index: 0, kind: input, shape index: {}]
  %s1 = inlined_call_operand.vmem [shape: f32[8,32], index: 1, kind: input, shape index: {}]
  %s2 = inlined_call_operand.vmem [shape: f32[32,8], index: 2, kind: input, shape index: {}]
  %s3 = inlined_call_operand.vmem [shape: f32[2,32,1], index: 3, kind: output, shape index: {}]
  %s4 = sld [smem:[#allocation0]]
  $region57: #{tpu_custom_call.1} parent=0
    _
  %s6 = ssub.s32 1, %s4
  %s7 = scalar_select 0, %s6, %s4
  $region1: #{tpu_custom_call.1} parent=0
    #allocation4 [shape = 'u8[524288]{0}', space=vmem, size = 0x80000, scoped, tag = 'input window, operand 0']
    #allocation5 [shape = 's32[2]{0}', space=sflag, size = 0x8, scoped, tag = 'scoped memory for tpu_custom_call.1']
    %8 = vsyncpa [#allocation5], 0
    %s9 = scalar_lea.sflag [#allocation5], 1
    %10 = vsyncpa %s9, 0
    loop: start=0, step=1, limit=4
    $region2: #{tpu_custom_call.1} parent=1 // loop_pre_header
      _
    $region3: #{tpu_custom_call.1} parent=1 // loop_header
      %s12 = sphi 0, %s16
      %p13 = scmp.ge.s32.totalorder %s12, 4
      %s19 = sphi 0, %s38
      %s20 = sphi 0, %s34
      %s21 = sphi 0, %s30
      %s22 = sphi 0, %s19
      %s23 = sphi 0, %s20
      %s24 = sphi 0, %s21
      %s25 = sphi 0, %s22
      %s26 = sphi 0, %s23
      %s27 = sphi 0, %s24
      %s45 = sphi 0, %s47
      %s48 = sphi 0, %s45
      %s49 = sphi 0, %s48
      %s65 = sphi 0, %s49
      %s69 = sphi 0, %s69
      %s71 = sphi 0, %s69
      %s72 = sphi 0, %s71
      %s86 = sphi 0, %s72
      %s90 = sphi 0, %s90
      %s92 = sphi 0, %s90
      %s93 = sphi 0, %s92
      %s107 = sphi 0, %s93
      %s113 = sphi 0, %s115
      %s116 = sphi 0, %s113
      %s117 = sphi 0, %s116
      %s133 = sphi 0, %s117
    $region4: #{tpu_custom_call.1} parent=1 // loop_header_branch
      %15 = sbr.rel (%p13) target = $region8
    $region5: #{tpu_custom_call.1} parent=1 // loop_body
      %s17 = ssub.s32 %s12, 1
      %s18 = ssub.s32 %s12, 2
      %s28 = sadd.s32 1, %s21
      %p29 = scmp.ge.s32.totalorder %s28, 1
      %s30 = scalar_select %p29, 0, %s28
      %s31 = sadd.s32 1, %s20
      %s32 = scalar_select %p29, %s31, %s20
      %p33 = scmp.ge.s32.totalorder %s32, 1
      %s34 = scalar_select %p33, 0, %s32
      %s35 = sadd.s32 1, %s19
      %s36 = scalar_select %p33, %s35, %s19
      %p37 = scmp.ge.s32.totalorder %s36, 2
      %s38 = scalar_select %p37, 0, %s36
      %s39 = ssub.s32 %s19, %s38
      %s40 = ssub.s32 %s20, %s34
      %s41 = sor.u32 %s39, %s40
      %s42 = ssub.s32 %s21, %s30
      %s43 = sor.u32 %s41, %s42
      %p44 = scmp.eq.s32.totalorder %s43, 0
      %s46 = sadd.s32 %s45, 1
      %s47 = scalar_select %p44, %s45, %s46
      %p50 = pneg %p44
      %p51 = scmp.eq.s32.totalorder %s12, 1
      %p52 = por %p50, %p51
      %p53 = scmp.ne.s32.totalorder %s45, %s48
      %p54 = scmp.eq.s32.totalorder %s12, 0
      %p55 = por %p53, %p54
      %p56 = scmp.ne.s32.totalorder %s45, %s48
      %p57 = scmp.eq.s32.totalorder %s17, 1
      %p58 = por %p56, %p57
      %p59 = scmp.ne.s32.totalorder %s48, %s49
      %p60 = scmp.eq.s32.totalorder %s17, 0
      %p61 = por %p59, %p60
      %p62 = scmp.ne.s32.totalorder %s48, %s49
      %p63 = scmp.eq.s32.totalorder %s18, 1
      %p64 = por %p62, %p63
      %p66 = scmp.ne.s32.totalorder %s49, %s65
      %p67 = scmp.eq.s32.totalorder %s18, 0
      %p68 = por %p66, %p67
      %s70 = sadd.s32 %s69, 1
      %p73 = scmp.eq.s32.totalorder %s12, 1
      %p74 = scmp.ne.s32.totalorder %s69, %s71
      %p75 = scmp.eq.s32.totalorder %s12, 0
      %p76 = por %p74, %p75
      %p77 = scmp.ne.s32.totalorder %s69, %s71
      %p78 = scmp.eq.s32.totalorder %s17, 1
      %p79 = por %p77, %p78
      %p80 = scmp.ne.s32.totalorder %s71, %s72
      %p81 = scmp.eq.s32.totalorder %s17, 0
      %p82 = por %p80, %p81
      %p83 = scmp.ne.s32.totalorder %s71, %s72
      %p84 = scmp.eq.s32.totalorder %s18, 1
      %p85 = por %p83, %p84
      %p87 = scmp.ne.s32.totalorder %s72, %s86
      %p88 = scmp.eq.s32.totalorder %s18, 0
      %p89 = por %p87, %p88
      %s91 = sadd.s32 %s90, 1
      %p94 = scmp.eq.s32.totalorder %s12, 1
      %p95 = scmp.ne.s32.totalorder %s90, %s92
      %p96 = scmp.eq.s32.totalorder %s12, 0
      %p97 = por %p95, %p96
      %p98 = scmp.ne.s32.totalorder %s90, %s92
      %p99 = scmp.eq.s32.totalorder %s17, 1
      %p100 = por %p98, %p99
      %p101 = scmp.ne.s32.totalorder %s92, %s93
      %p102 = scmp.eq.s32.totalorder %s17, 0
      %p103 = por %p101, %p102
      %p104 = scmp.ne.s32.totalorder %s92, %s93
      %p105 = scmp.eq.s32.totalorder %s18, 1
      %p106 = por %p104, %p105
      %p108 = scmp.ne.s32.totalorder %s93, %s107
      %p109 = scmp.eq.s32.totalorder %s18, 0
      %p110 = por %p108, %p109
      %s111 = ssub.s32 %s19, %s38
      %p112 = scmp.eq.s32.totalorder %s111, 0
      %s114 = sadd.s32 %s113, 1
      %s115 = scalar_select %p112, %s113, %s114
      %p118 = pneg %p112
      %p119 = scmp.eq.s32.totalorder %s12, 1
      %p120 = por %p118, %p119
      %p121 = scmp.ne.s32.totalorder %s113, %s116
      %p122 = scmp.eq.s32.totalorder %s12, 0
      %p123 = por %p121, %p122
      %p124 = scmp.ne.s32.totalorder %s113, %s116
      %p125 = scmp.eq.s32.totalorder %s17, 1
      %p126 = por %p124, %p125
      %p127 = scmp.ne.s32.totalorder %s116, %s117
      %p128 = scmp.eq.s32.totalorder %s17, 0
      %p129 = por %p127, %p128
      %p130 = scmp.ne.s32.totalorder %s116, %s117
      %p131 = scmp.eq.s32.totalorder %s18, 1
      %p132 = por %p130, %p131
      %p134 = scmp.ne.s32.totalorder %s117, %s133
      %p135 = scmp.eq.s32.totalorder %s18, 0
      %p136 = por %p134, %p135
      %p137 = scmp.le.s32.totalorder 1, %s12
      %p138 = scmp.lt.s32.totalorder %s12, 3
      %p139 = pnand %p137, %p138
      %p140 = pneg %p139
      // Predicated region
      $region9: #{tpu_custom_call.1} parent=5 // pred_check
        _
      $region10: #{tpu_custom_call.1} parent=5 // pred_check_branch
        %142 = sbr.rel (%p139) target = $region12
      $region11: #{tpu_custom_call.1} parent=5 // pred_region
        %s143 = ssub.s32 %s12, 1
        // Predicated region
        $region13: #{tpu_custom_call.1} parent=11 // pred_check
          %p144 = pneg %p82
        $region14: #{tpu_custom_call.1} parent=11 // pred_check_branch
          %146 = sbr.rel (%p144) target = $region16
        $region15: #{tpu_custom_call.1} parent=11 // pred_region
          _
        $region16: #{tpu_custom_call.1} parent=11 // pred_fallthru
          _
        // Predicated region
        $region17: #{tpu_custom_call.1} parent=11 // pred_check
          %p147 = pneg %p103
        $region18: #{tpu_custom_call.1} parent=11 // pred_check_branch
          %149 = sbr.rel (%p147) target = $region20
        $region19: #{tpu_custom_call.1} parent=11 // pred_region
          _
        $region20: #{tpu_custom_call.1} parent=11 // pred_fallthru
          _
      $region12: #{tpu_custom_call.1} parent=5 // pred_fallthru
        _
      %p150 = scmp.lt.s32.totalorder %s12, 2
      // Predicated region
      $region21: #{tpu_custom_call.1} parent=5 // pred_check
        %p151 = pneg %p150
      $region22: #{tpu_custom_call.1} parent=5 // pred_check_branch
        %153 = sbr.rel (%p151) target = $region24
      $region23: #{tpu_custom_call.1} parent=5 // pred_region
        // Predicated region
        $region25: #{tpu_custom_call.1} parent=23 // pred_check
          %p154 = pneg %p55
        $region26: #{tpu_custom_call.1} parent=23 // pred_check_branch
          %156 = sbr.rel (%p154) target = $region28
        $region27: #{tpu_custom_call.1} parent=23 // pred_region
          %s157 = sand.u32 %s45, 1
          %s158 = scalar_lea.sflag [#allocation5], %s157
          %s159 = sand.u32 %s45, 1
          %s160 = smul.addr %s159, 512
          %s161 = scalar_lea.vmem [#allocation4], %s160
          %s162 = smul.u32 8, %s20
          %s163 = smul.u32 2, %s21
          %165 = vsyncadd %s158, 0
          %s166 = smul.addr %s162, 8
          %s167 = sadd.s32 %s163, %s166
          %s168 = smul.addr %s19, 64
          %s169 = sadd.s32 %s167, %s168
          %s170 = smul.addr %s169, 8
          %s171 = scalar_lea.hbm %s0, %s170
          %s172 = sshll.u32 %s171, 4
          %s173 = int_to_ptr.hbm [resolvable:$true] %s172
          %s174 = sshll.u32 %s161, 4
          %s175 = int_to_ptr.vmem [resolvable:$true] %s174
          %180 = dma.hbm_to_vmem [thread:$0]  %s173, 8192, %s175, %s158, 256, 256, 16
        $region28: #{tpu_custom_call.1} parent=23 // pred_fallthru
          _
      $region24: #{tpu_custom_call.1} parent=5 // pred_fallthru
        _
      %p181 = scmp.le.s32.totalorder 1, %s12
      %p182 = scmp.lt.s32.totalorder %s12, 3
      %p183 = pnand %p181, %p182
      %p184 = pneg %p183
      // Predicated region
      $region29: #{tpu_custom_call.1} parent=5 // pred_check
        _
      $region30: #{tpu_custom_call.1} parent=5 // pred_check_branch
        %186 = sbr.rel (%p183) target = $region32
      $region31: #{tpu_custom_call.1} parent=5 // pred_region
        %s187 = ssub.s32 %s12, 1
        %s188 = sand.u32 %s48, 1
        %s189 = scalar_lea.sflag [#allocation5], %s188
        %s190 = sand.u32 %s48, 1
        %s191 = smul.addr %s190, 512
        %s192 = scalar_lea.vmem [#allocation4], %s191
        // Predicated region
        $region33: #{tpu_custom_call.1} parent=31 // pred_check
          %p193 = pneg %p61
        $region34: #{tpu_custom_call.1} parent=31 // pred_check_branch
          %195 = sbr.rel (%p193) target = $region36
        $region35: #{tpu_custom_call.1} parent=31 // pred_region
          %197 = dma.done %s189, 8192
        $region36: #{tpu_custom_call.1} parent=31 // pred_fallthru
          _
        %s198 = sand.u32 %s48, 1
        %s199 = scalar_lea.sflag [#allocation5], %s198
        %s200 = sand.u32 %s48, 1
        %s201 = smul.addr %s200, 512
        %s202 = scalar_lea.vmem [#allocation4], %s201
        %p203 = pneg %p61
        %p204 = pneg %p58
        %p205 = pneg %p82
        %p206 = pneg %p79
        %p207 = pneg %p103
        %p208 = pneg %p100
        %p209 = pneg %p129
        %p210 = pneg %p126
        %p211 = scmp.lt.s32.totalorder %s22, 1
        %s212 = scalar_select %p211, %s22, 1
        %s213 = smul.addr %s212, 4
        %s214 = smul.addr %s213, 8
        %s215 = scalar_lea.vmem %s3, %s214
        %s216 = smul.u32 8, %s23
        %s217 = smul.u32 2, %s24
        %p218 = scmp.lt.s32.totalorder %s22, 1
        %s219 = scalar_select %p218, %s22, 1
        %s220 = smul.addr %s219, 4
        %s221 = smul.addr %s220, 8
        %s222 = scalar_lea.vmem %s3, %s221
        %p223 = scmp.eq.s32.totalorder %s23, 0
        %p224 = scmp.eq.s32.totalorder %s24, 0
        %p225 = pnand %p223, %p224
        %p226 = pneg %p225
        // Predicated region
        $region37: #{tpu_custom_call.1} parent=31 // pred_check
          _
        $region38: #{tpu_custom_call.1} parent=31 // pred_check_branch
          %228 = sbr.rel (%p225) target = $region40
        $region39: #{tpu_custom_call.1} parent=31 // pred_region
          %229 = vst [vmem:[#allocation2] sm:$0xff] 0.0
          %230 = vst [vmem:[#allocation2 + $0x8] sm:$0xff] 0.0
          %231 = vst [vmem:[#allocation2 + $0x10] sm:$0xff] 0.0
          %232 = vst [vmem:[#allocation2 + $0x18] sm:$0xff] 0.0
          %233 = vst [vmem:[#allocation2 + $0x20] sm:$0xff] 0.0
          %234 = vst [vmem:[#allocation2 + $0x28] sm:$0xff] 0.0
          %235 = vst [vmem:[#allocation2 + $0x30] sm:$0xff] 0.0
          %236 = vst [vmem:[#allocation2 + $0x38] sm:$0xff] 0.0
          %237 = vst [vmem:[#allocation3] sm:$0xff] -inf
          %238 = vst [vmem:[#allocation3 + $0x8] sm:$0xff] -inf
          %239 = vst [vmem:[#allocation3 + $0x10] sm:$0xff] -inf
          %240 = vst [vmem:[#allocation3 + $0x18] sm:$0xff] -inf
          %241 = vst [vmem:[#allocation3 + $0x20] sm:$0xff] -inf
          %242 = vst [vmem:[#allocation3 + $0x28] sm:$0xff] -inf
          %243 = vst [vmem:[#allocation3 + $0x30] sm:$0xff] -inf
          %244 = vst [vmem:[#allocation3 + $0x38] sm:$0xff] -inf
        $region40: #{tpu_custom_call.1} parent=31 // pred_fallthru
          _
        %v245 = vld [vmem:[%s192] sm:$0xff]
        %v246 = vld [vmem:[%s192 + $0x8] sm:$0xff]
        %v247 = vld [vmem:[%s192 + $0x10] sm:$0xff]
        %v248 = vld [vmem:[%s192 + $0x18] sm:$0xff]
        %v249 = vld [vmem:[%s192 + $0x20] sm:$0xff]
        %v250 = vld [vmem:[%s192 + $0x28] sm:$0xff]
        %v251 = vld [vmem:[%s192 + $0x30] sm:$0xff]
        %v252 = vld [vmem:[%s192 + $0x38] sm:$0xff]
        %v253 = vld [vmem:[%s192 + $0x40] sm:$0xff]
        %v254 = vld [vmem:[%s192 + $0x48] sm:$0xff]
        %v255 = vld [vmem:[%s192 + $0x50] sm:$0xff]
        %v256 = vld [vmem:[%s192 + $0x58] sm:$0xff]
        %v257 = vld [vmem:[%s192 + $0x60] sm:$0xff]
        %v258 = vld [vmem:[%s192 + $0x68] sm:$0xff]
        %v259 = vld [vmem:[%s192 + $0x70] sm:$0xff]
        %v260 = vld [vmem:[%s192 + $0x78] sm:$0xff]
        %v261 = vld [vmem:[%s192 + $0x80] sm:$0xff]
        %v262 = vld [vmem:[%s192 + $0x88] sm:$0xff]
        %v263 = vld [vmem:[%s192 + $0x90] sm:$0xff]
        %v264 = vld [vmem:[%s192 + $0x98] sm:$0xff]
        %v265 = vld [vmem:[%s192 + $0xa0] sm:$0xff]
        %v266 = vld [vmem:[%s192 + $0xa8] sm:$0xff]
        %v267 = vld [vmem:[%s192 + $0xb0] sm:$0xff]
        %v268 = vld [vmem:[%s192 + $0xb8] sm:$0xff]
        %v269 = vld [vmem:[%s192 + $0xc0] sm:$0xff]
        %v270 = vld [vmem:[%s192 + $0xc8] sm:$0xff]
        %v271 = vld [vmem:[%s192 + $0xd0] sm:$0xff]
        %v272 = vld [vmem:[%s192 + $0xd8] sm:$0xff]
        %v273 = vld [vmem:[%s192 + $0xe0] sm:$0xff]
        %v274 = vld [vmem:[%s192 + $0xe8] sm:$0xff]
        %v275 = vld [vmem:[%s192 + $0xf0] sm:$0xff]
        %v276 = vld [vmem:[%s192 + $0xf8] sm:$0xff]
        %v277 = vld [vmem:[%s192 + $0x100] sm:$0xff]
        %v278 = vld [vmem:[%s192 + $0x108] sm:$0xff]
        %v279 = vld [vmem:[%s192 + $0x110] sm:$0xff]
        %v280 = vld [vmem:[%s192 + $0x118] sm:$0xff]
        %v281 = vld [vmem:[%s192 + $0x120] sm:$0xff]
        %v282 = vld [vmem:[%s192 + $0x128] sm:$0xff]
        %v283 = vld [vmem:[%s192 + $0x130] sm:$0xff]
        %v284 = vld [vmem:[%s192 + $0x138] sm:$0xff]
        %v285 = vld [vmem:[%s192 + $0x140] sm:$0xff]
        %v286 = vld [vmem:[%s192 + $0x148] sm:$0xff]
        %v287 = vld [vmem:[%s192 + $0x150] sm:$0xff]
        %v288 = vld [vmem:[%s192 + $0x158] sm:$0xff]
        %v289 = vld [vmem:[%s192 + $0x160] sm:$0xff]
        %v290 = vld [vmem:[%s192 + $0x168] sm:$0xff]
        %v291 = vld [vmem:[%s192 + $0x170] sm:$0xff]
        %v292 = vld [vmem:[%s192 + $0x178] sm:$0xff]
        %v293 = vld [vmem:[%s192 + $0x180] sm:$0xff]
        %v294 = vld [vmem:[%s192 + $0x188] sm:$0xff]
        %v295 = vld [vmem:[%s192 + $0x190] sm:$0xff]
        %v296 = vld [vmem:[%s192 + $0x198] sm:$0xff]
        %v297 = vld [vmem:[%s192 + $0x1a0] sm:$0xff]
        %v298 = vld [vmem:[%s192 + $0x1a8] sm:$0xff]
        %v299 = vld [vmem:[%s192 + $0x1b0] sm:$0xff]
        %v300 = vld [vmem:[%s192 + $0x1b8] sm:$0xff]
        %v301 = vld [vmem:[%s192 + $0x1c0] sm:$0xff]
        %v302 = vld [vmem:[%s192 + $0x1c8] sm:$0xff]
        %v303 = vld [vmem:[%s192 + $0x1d0] sm:$0xff]
        %v304 = vld [vmem:[%s192 + $0x1d8] sm:$0xff]
        %v305 = vld [vmem:[%s192 + $0x1e0] sm:$0xff]
        %v306 = vld [vmem:[%s192 + $0x1e8] sm:$0xff]
        %v307 = vld [vmem:[%s192 + $0x1f0] sm:$0xff]
        %v308 = vld [vmem:[%s192 + $0x1f8] sm:$0xff]
        %v309 = vld [vmem:[#allocation2] sm:$0xff]
        %v310 = vld [vmem:[#allocation2 + $0x8] sm:$0xff]
        %v311 = vld [vmem:[#allocation2 + $0x10] sm:$0xff]
        %v312 = vld [vmem:[#allocation2 + $0x18] sm:$0xff]
        %v313 = vld [vmem:[#allocation2 + $0x20] sm:$0xff]
        %v314 = vld [vmem:[#allocation2 + $0x28] sm:$0xff]
        %v315 = vld [vmem:[#allocation2 + $0x30] sm:$0xff]
        %v316 = vld [vmem:[#allocation2 + $0x38] sm:$0xff]
        %v317 = vadd.f32 %v245, %v253
        %v318 = vadd.f32 %v317, %v261
        %v319 = vadd.f32 %v318, %v269
        %v320 = vadd.f32 %v319, %v277
        %v321 = vadd.f32 %v320, %v285
        %v322 = vadd.f32 %v321, %v293
        %v323 = vadd.f32 %v322, %v301
        %v324 = vadd.f32 %v246, %v254
        %v325 = vadd.f32 %v324, %v262
        %v326 = vadd.f32 %v325, %v270
        %v327 = vadd.f32 %v326, %v278
        %v328 = vadd.f32 %v327, %v286
        %v329 = vadd.f32 %v328, %v294
        %v330 = vadd.f32 %v329, %v302
        %v331 = vadd.f32 %v247, %v255
        %v332 = vadd.f32 %v331, %v263
        %v333 = vadd.f32 %v332, %v271
        %v334 = vadd.f32 %v333, %v279
        %v335 = vadd.f32 %v334, %v287
        %v336 = vadd.f32 %v335, %v295
        %v337 = vadd.f32 %v336, %v303
        %v338 = vadd.f32 %v248, %v256
        %v339 = vadd.f32 %v338, %v264
        %v340 = vadd.f32 %v339, %v272
        %v341 = vadd.f32 %v340, %v280
        %v342 = vadd.f32 %v341, %v288
        %v343 = vadd.f32 %v342, %v296
        %v344 = vadd.f32 %v343, %v304
        %v345 = vadd.f32 %v249, %v257
        %v346 = vadd.f32 %v345, %v265
        %v347 = vadd.f32 %v346, %v273
        %v348 = vadd.f32 %v347, %v281
        %v349 = vadd.f32 %v348, %v289
        %v350 = vadd.f32 %v349, %v297
        %v351 = vadd.f32 %v350, %v305
        %v352 = vadd.f32 %v250, %v258
        %v353 = vadd.f32 %v352, %v266
        %v354 = vadd.f32 %v353, %v274
        %v355 = vadd.f32 %v354, %v282
        %v356 = vadd.f32 %v355, %v290
        %v357 = vadd.f32 %v356, %v298
        %v358 = vadd.f32 %v357, %v306
        %v359 = vadd.f32 %v251, %v259
        %v360 = vadd.f32 %v359, %v267
        %v361 = vadd.f32 %v360, %v275
        %v362 = vadd.f32 %v361, %v283
        %v363 = vadd.f32 %v362, %v291
        %v364 = vadd.f32 %v363, %v299
        %v365 = vadd.f32 %v364, %v307
        %v366 = vadd.f32 %v252, %v260
        %v367 = vadd.f32 %v366, %v268
        %v368 = vadd.f32 %v367, %v276
        %v369 = vadd.f32 %v368, %v284
        %v370 = vadd.f32 %v369, %v292
        %v371 = vadd.f32 %v370, %v300
        %v372 = vadd.f32 %v371, %v308
        %v373 = vadd.f32 %v309, %v323
        %v374 = vadd.f32 %v310, %v330
        %v375 = vadd.f32 %v311, %v337
        %v376 = vadd.f32 %v312, %v344
        %v377 = vadd.f32 %v313, %v351
        %v378 = vadd.f32 %v314, %v358
        %v379 = vadd.f32 %v315, %v365
        %v380 = vadd.f32 %v316, %v372
        %381 = vst [vmem:[#allocation2] sm:$0xff] %v373
        %382 = vst [vmem:[#allocation2 + $0x8] sm:$0xff] %v374
        %383 = vst [vmem:[#allocation2 + $0x10] sm:$0xff] %v375
        %384 = vst [vmem:[#allocation2 + $0x18] sm:$0xff] %v376
        %385 = vst [vmem:[#allocation2 + $0x20] sm:$0xff] %v377
        %386 = vst [vmem:[#allocation2 + $0x28] sm:$0xff] %v378
        %387 = vst [vmem:[#allocation2 + $0x30] sm:$0xff] %v379
        %388 = vst [vmem:[#allocation2 + $0x38] sm:$0xff] %v380
        %v389 = vld [vmem:[#allocation3] sm:$0xff]
        %v390 = vld [vmem:[#allocation3 + $0x8] sm:$0xff]
        %v391 = vld [vmem:[#allocation3 + $0x10] sm:$0xff]
        %v392 = vld [vmem:[#allocation3 + $0x18] sm:$0xff]
        %v393 = vld [vmem:[#allocation3 + $0x20] sm:$0xff]
        %v394 = vld [vmem:[#allocation3 + $0x28] sm:$0xff]
        %v395 = vld [vmem:[#allocation3 + $0x30] sm:$0xff]
        %v396 = vld [vmem:[#allocation3 + $0x38] sm:$0xff]
        %v397 = vmax.f32 %v245, %v253
        %v398 = vmax.f32 %v397, %v261
        %v399 = vmax.f32 %v398, %v269
        %v400 = vmax.f32 %v399, %v277
        %v401 = vmax.f32 %v400, %v285
        %v402 = vmax.f32 %v401, %v293
        %v403 = vmax.f32 %v402, %v301
        %v404 = vmax.f32 %v246, %v254
        %v405 = vmax.f32 %v404, %v262
        %v406 = vmax.f32 %v405, %v270
        %v407 = vmax.f32 %v406, %v278
        %v408 = vmax.f32 %v407, %v286
        %v409 = vmax.f32 %v408, %v294
        %v410 = vmax.f32 %v409, %v302
        %v411 = vmax.f32 %v247, %v255
        %v412 = vmax.f32 %v411, %v263
        %v413 = vmax.f32 %v412, %v271
        %v414 = vmax.f32 %v413, %v279
        %v415 = vmax.f32 %v414, %v287
        %v416 = vmax.f32 %v415, %v295
        %v417 = vmax.f32 %v416, %v303
        %v418 = vmax.f32 %v248, %v256
        %v419 = vmax.f32 %v418, %v264
        %v420 = vmax.f32 %v419, %v272
        %v421 = vmax.f32 %v420, %v280
        %v422 = vmax.f32 %v421, %v288
        %v423 = vmax.f32 %v422, %v296
        %v424 = vmax.f32 %v423, %v304
        %v425 = vmax.f32 %v249, %v257
        %v426 = vmax.f32 %v425, %v265
        %v427 = vmax.f32 %v426, %v273
        %v428 = vmax.f32 %v427, %v281
        %v429 = vmax.f32 %v428, %v289
        %v430 = vmax.f32 %v429, %v297
        %v431 = vmax.f32 %v430, %v305
        %v432 = vmax.f32 %v250, %v258
        %v433 = vmax.f32 %v432, %v266
        %v434 = vmax.f32 %v433, %v274
        %v435 = vmax.f32 %v434, %v282
        %v436 = vmax.f32 %v435, %v290
        %v437 = vmax.f32 %v436, %v298
        %v438 = vmax.f32 %v437, %v306
        %v439 = vmax.f32 %v251, %v259
        %v440 = vmax.f32 %v439, %v267
        %v441 = vmax.f32 %v440, %v275
        %v442 = vmax.f32 %v441, %v283
        %v443 = vmax.f32 %v442, %v291
        %v444 = vmax.f32 %v443, %v299
        %v445 = vmax.f32 %v444, %v307
        %v446 = vmax.f32 %v252, %v260
        %v447 = vmax.f32 %v446, %v268
        %v448 = vmax.f32 %v447, %v276
        %v449 = vmax.f32 %v448, %v284
        %v450 = vmax.f32 %v449, %v292
        %v451 = vmax.f32 %v450, %v300
        %v452 = vmax.f32 %v451, %v308
        %v453 = vmax.f32 %v389, %v403
        %v454 = vmax.f32 %v390, %v410
        %v455 = vmax.f32 %v391, %v417
        %v456 = vmax.f32 %v392, %v424
        %v457 = vmax.f32 %v393, %v431
        %v458 = vmax.f32 %v394, %v438
        %v459 = vmax.f32 %v395, %v445
        %v460 = vmax.f32 %v396, %v452
        %461 = vst [vmem:[#allocation3] sm:$0xff] %v453
        %462 = vst [vmem:[#allocation3 + $0x8] sm:$0xff] %v454
        %463 = vst [vmem:[#allocation3 + $0x10] sm:$0xff] %v455
        %464 = vst [vmem:[#allocation3 + $0x18] sm:$0xff] %v456
        %465 = vst [vmem:[#allocation3 + $0x20] sm:$0xff] %v457
        %466 = vst [vmem:[#allocation3 + $0x28] sm:$0xff] %v458
        %467 = vst [vmem:[#allocation3 + $0x30] sm:$0xff] %v459
        %468 = vst [vmem:[#allocation3 + $0x38] sm:$0xff] %v460
        // Predicated region
        $region41: #{tpu_custom_call.1} parent=31 // pred_check
          _
        $region42: #{tpu_custom_call.1} parent=31 // pred_check_branch
          %470 = sbr.rel (%p225) target = $region44
        $region43: #{tpu_custom_call.1} parent=31 // pred_region
          %v471 = vld [vmem:[#allocation2] sm:$0xff]
          %v472 = vld [vmem:[#allocation2 + $0x8] sm:$0xff]
          %v473 = vld [vmem:[#allocation2 + $0x10] sm:$0xff]
          %v474 = vld [vmem:[#allocation2 + $0x18] sm:$0xff]
          %v475 = vld [vmem:[#allocation2 + $0x20] sm:$0xff]
          %v476 = vld [vmem:[#allocation2 + $0x28] sm:$0xff]
          %v477 = vld [vmem:[#allocation2 + $0x30] sm:$0xff]
          %v478 = vld [vmem:[#allocation2 + $0x38] sm:$0xff]
          %v479 = vadd.f32 %v471, %v472
          %480 = vadd.xlane.f32.xlu0 %v479
          %v481 = vpop.xlane.xlu0 %480
          %v482 = vadd.f32 %v473, %v474
          %483 = vadd.xlane.f32.xlu0 %v482
          %v484 = vpop.xlane.xlu0 %483
          %v485 = vadd.f32 %v475, %v476
          %486 = vadd.xlane.f32.xlu0 %v485
          %v487 = vpop.xlane.xlu0 %486
          %v488 = vadd.f32 %v477, %v478
          %489 = vadd.xlane.f32.xlu0 %v488
          %v490 = vpop.xlane.xlu0 %489
          %v491 = vmul.f32 %v481, 0.00048828125
          %v492 = vmul.f32 %v484, 0.00048828125
          %v493 = vmul.f32 %v487, 0.00048828125
          %v494 = vmul.f32 %v490, 0.00048828125
          %v495 = vld [vmem:[#allocation3] sm:$0xff]
          %v496 = vld [vmem:[#allocation3 + $0x8] sm:$0xff]
          %v497 = vld [vmem:[#allocation3 + $0x10] sm:$0xff]
          %v498 = vld [vmem:[#allocation3 + $0x18] sm:$0xff]
          %v499 = vld [vmem:[#allocation3 + $0x20] sm:$0xff]
          %v500 = vld [vmem:[#allocation3 + $0x28] sm:$0xff]
          %v501 = vld [vmem:[#allocation3 + $0x30] sm:$0xff]
          %v502 = vld [vmem:[#allocation3 + $0x38] sm:$0xff]
          %v503 = vmax.f32 %v495, %v496
          %504 = vmax.xlane.f32.xlu0 %v503
          %v505 = vpop.xlane.xlu0 %504
          %v506 = vmax.f32 %v497, %v498
          %507 = vmax.xlane.f32.xlu0 %v506
          %v508 = vpop.xlane.xlu0 %507
          %v509 = vmax.f32 %v499, %v500
          %510 = vmax.xlane.f32.xlu0 %v509
          %v511 = vpop.xlane.xlu0 %510
          %v512 = vmax.f32 %v501, %v502
          %513 = vmax.xlane.f32.xlu0 %v512
          %v514 = vpop.xlane.xlu0 %513
          %vm515 = vcmask 7168
          %v516 = vsel %vm515, %v491, %v505
          %v517 = vsel %vm515, %v492, %v508
          %v518 = vsel %vm515, %v493, %v511
          %v519 = vsel %vm515, %v494, %v514
          %v520 = vld [vmem:[%s1] sm:$0xff]
          %vm521 = vcmask 261120
          %v523 = vsel %vm521, %v520, 0
          %525 = vmatpush.msra.mxu0 0.0
          %526 = vmatpush.msra.mxu0 0.0
          %527 = vmatpush.msra.mxu0 0.0
          %528 = vmatpush.msra.mxu0 0.0
          %529 = vmatpush.msra.mxu0 0.0
          %530 = vmatpush.msra.mxu0 0.0
          %531 = vmatpush.msra.mxu0 0.0
          %532 = vmatpush.msra.mxu0 0.0
          %533 = vmatpush.msra.mxu0 0.0
          %534 = vmatpush.msra.mxu0 0.0
          %535 = vmatpush.msra.mxu0 0.0
          %536 = vmatpush.msra.mxu0 0.0
          %537 = vmatpush.msra.mxu0 %v519
          %538 = vmatpush.msra.mxu0 %v518
          %539 = vmatpush.msra.mxu0 %v517
          %540 = vmatpush.msra.mxu0 %v516
          %541 = vmatmul.f32.gmra.mxu0 %v523
          %v542 = vpop.f32.mrf.mxu0
          %v543 = vadd.f32 0.0, %v542
          %544 = vdwg.mxu0
          %v545 = vmax.f32 %v543, 0.0
          %v546 = vld [vmem:[%s2] sm:$0xff]
          %v547 = vld [vmem:[%s2 + $0x8] sm:$0xff]
          %v548 = vld [vmem:[%s2 + $0x10] sm:$0xff]
          %v549 = vld [vmem:[%s2 + $0x18] sm:$0xff]
          %vm550 = vcmask 64512
          %v552 = vsel %vm550, %v546, 0
          %v555 = vsel %vm550, %v547, 0
          %v558 = vsel %vm550, %v548, 0
          %v561 = vsel %vm550, %v549, 0
          %563 = vmatpush.msra.mxu0 0.0
          %564 = vmatpush.msra.mxu0 0.0
          %565 = vmatpush.msra.mxu0 0.0
          %566 = vmatpush.msra.mxu0 0.0
          %567 = vmatpush.msra.mxu0 0.0
          %568 = vmatpush.msra.mxu0 0.0
          %569 = vmatpush.msra.mxu0 0.0
          %570 = vmatpush.msra.mxu0 0.0
          %571 = vmatpush.msra.mxu0 0.0
          %572 = vmatpush.msra.mxu0 0.0
          %573 = vmatpush.msra.mxu0 0.0
          %574 = vmatpush.msra.mxu0 0.0
          %575 = vmatpush.msra.mxu0 0.0
          %576 = vmatpush.msra.mxu0 0.0
          %577 = vmatpush.msra.mxu0 0.0
          %578 = vmatpush.msra.mxu0 %v545
          %579 = vmatmul.f32.gmra.mxu0 %v552
          %v580 = vpop.f32.mrf.mxu0
          %v581 = vadd.f32 0.0, %v580
          %582 = vmatmul.f32.gmra.mxu0 %v555
          %v583 = vpop.f32.mrf.mxu0
          %v584 = vadd.f32 0.0, %v583
          %585 = vmatmul.f32.gmra.mxu0 %v558
          %v586 = vpop.f32.mrf.mxu0
          %v587 = vadd.f32 0.0, %v586
          %588 = vmatmul.f32.gmra.mxu0 %v561
          %v589 = vpop.f32.mrf.mxu0
          %v590 = vadd.f32 0.0, %v589
          %591 = vdwg.mxu0
          %596 = vrot.lane.b32.xlu0 %v581, 127
          %v597 = vpop.permute.xlu0 %596
          %598 = vrot.lane.b32.xlu0 %v584, 127
          %v599 = vpop.permute.xlu0 %598
          %600 = vrot.lane.b32.xlu0 %v587, 127
          %v601 = vpop.permute.xlu0 %600
          %602 = vrot.lane.b32.xlu0 %v590, 127
          %v603 = vpop.permute.xlu0 %602
          %v608 = vadd.f32 %v581, %v597
          %v609 = vadd.f32 %v584, %v599
          %v610 = vadd.f32 %v587, %v601
          %v611 = vadd.f32 %v590, %v603
          %v612 = vxor.u32 %v608, 2147483648
          %v613 = vxor.u32 %v609, 2147483648
          %v614 = vxor.u32 %v610, 2147483648
          %v615 = vxor.u32 %v611, 2147483648
          %v616 = vmul.f32 %v612, 1.442695
          %v617 = vpow.pop %v616
          %v618 = vmul.f32 %v613, 1.442695
          %v619 = vpow.pop %v618
          %v620 = vmul.f32 %v614, 1.442695
          %v621 = vpow.pop %v620
          %v622 = vmul.f32 %v615, 1.442695
          %v623 = vpow.pop %v622
          %v624 = vadd.f32 %v617, 1.0
          %v625 = vadd.f32 %v619, 1.0
          %v626 = vadd.f32 %v621, 1.0
          %v627 = vadd.f32 %v623, 1.0
          %v628 = vrcp.pop %v624
          %v629 = vmul.f32 %v624, %v628
          %v630 = vsub.f32 1.0, %v629
          %v631 = vmul.f32 %v628, %v630
          %v632 = vadd.f32 %v628, %v631
          %vm633 = vweird.f32 %v624
          %vm634 = vweird.f32 %v628
          %vm635 = vmor %vm633, %vm634
          %v636 = vsel %vm635, %v628, %v632
          %v637 = vand.u32 2147483647, %v624
          %vm638 = vcmp.eq.f32.partialorder %v637, 8.507059e+37
          %v639 = vand.u32 %v624, 2147483648
          %v640 = vor.u32 1.1754944e-38, %v639
          %v641 = vsel %vm638, %v640, %v636
          %v642 = vmul.f32 1.0, %v641
          %v643 = vrcp.pop %v625
          %v644 = vmul.f32 %v625, %v643
          %v645 = vsub.f32 1.0, %v644
          %v646 = vmul.f32 %v643, %v645
          %v647 = vadd.f32 %v643, %v646
          %vm648 = vweird.f32 %v625
          %vm649 = vweird.f32 %v643
          %vm650 = vmor %vm648, %vm649
          %v651 = vsel %vm650, %v643, %v647
          %v652 = vand.u32 2147483647, %v625
          %vm653 = vcmp.eq.f32.partialorder %v652, 8.507059e+37
          %v654 = vand.u32 %v625, 2147483648
          %v655 = vor.u32 1.1754944e-38, %v654
          %v656 = vsel %vm653, %v655, %v651
          %v657 = vmul.f32 1.0, %v656
          %v658 = vrcp.pop %v626
          %v659 = vmul.f32 %v626, %v658
          %v660 = vsub.f32 1.0, %v659
          %v661 = vmul.f32 %v658, %v660
          %v662 = vadd.f32 %v658, %v661
          %vm663 = vweird.f32 %v626
          %vm664 = vweird.f32 %v658
          %vm665 = vmor %vm663, %vm664
          %v666 = vsel %vm665, %v658, %v662
          %v667 = vand.u32 2147483647, %v626
          %vm668 = vcmp.eq.f32.partialorder %v667, 8.507059e+37
          %v669 = vand.u32 %v626, 2147483648
          %v670 = vor.u32 1.1754944e-38, %v669
          %v671 = vsel %vm668, %v670, %v666
          %v672 = vmul.f32 1.0, %v671
          %v673 = vrcp.pop %v627
          %v674 = vmul.f32 %v627, %v673
          %v675 = vsub.f32 1.0, %v674
          %v676 = vmul.f32 %v673, %v675
          %v677 = vadd.f32 %v673, %v676
          %vm678 = vweird.f32 %v627
          %vm679 = vweird.f32 %v673
          %vm680 = vmor %vm678, %vm679
          %v681 = vsel %vm680, %v673, %v677
          %v682 = vand.u32 2147483647, %v627
          %vm683 = vcmp.eq.f32.partialorder %v682, 8.507059e+37
          %v684 = vand.u32 %v627, 2147483648
          %v685 = vor.u32 1.1754944e-38, %v684
          %v686 = vsel %vm683, %v685, %v681
          %v687 = vmul.f32 1.0, %v686
          %688 = vst.msk [vmem:[%s222] sm:$0xff] %vm515, %v642
          %689 = vst.msk [vmem:[%s222 + $0x8] sm:$0xff] %vm515, %v657
          %690 = vst.msk [vmem:[%s222 + $0x10] sm:$0xff] %vm515, %v672
          %691 = vst.msk [vmem:[%s222 + $0x18] sm:$0xff] %vm515, %v687
        $region44: #{tpu_custom_call.1} parent=31 // pred_fallthru
          _
        %p692 = scmp.lt.s32.totalorder %s22, 1
        %s693 = scalar_select %p692, %s22, 1
        %s694 = smul.addr %s693, 4
        %s695 = smul.addr %s694, 8
        %s696 = scalar_lea.vmem %s3, %s695
        // Predicated region
        $region45: #{tpu_custom_call.1} parent=31 // pred_check
          %p697 = pneg %p126
        $region46: #{tpu_custom_call.1} parent=31 // pred_check_branch
          %699 = sbr.rel (%p697) target = $region48
        $region47: #{tpu_custom_call.1} parent=31 // pred_region
          _
        $region48: #{tpu_custom_call.1} parent=31 // pred_fallthru
          _
      $region32: #{tpu_custom_call.1} parent=5 // pred_fallthru
        _
      %p700 = scmp.le.s32.totalorder 2, %s12
      // Predicated region
      $region49: #{tpu_custom_call.1} parent=5 // pred_check
        %p701 = pneg %p700
      $region50: #{tpu_custom_call.1} parent=5 // pred_check_branch
        %703 = sbr.rel (%p701) target = $region52
      $region51: #{tpu_custom_call.1} parent=5 // pred_region
        %s704 = ssub.s32 %s12, 2
        // Predicated region
        $region53: #{tpu_custom_call.1} parent=51 // pred_check
          %p705 = pneg %p132
        $region54: #{tpu_custom_call.1} parent=51 // pred_check_branch
          %707 = sbr.rel (%p705) target = $region56
        $region55: #{tpu_custom_call.1} parent=51 // pred_region
          %p708 = scmp.lt.s32.totalorder %s25, 1
          %s709 = scalar_select %p708, %s25, 1
          %s710 = smul.addr %s709, 4
          %s711 = smul.addr %s710, 8
          %s712 = scalar_lea.vmem %s3, %s711
        $region56: #{tpu_custom_call.1} parent=51 // pred_fallthru
          _
      $region52: #{tpu_custom_call.1} parent=5 // pred_fallthru
        _
    $region6: #{tpu_custom_call.1} parent=1 // loop_footer
      %s16 = sadd.s32 1, %s12
    $region7: #{tpu_custom_call.1} parent=1 // loop_footer_branch
      %11 = sbr.rel target = $region3
    $region8: #{tpu_custom_call.1} parent=1 // loop_exit
      _
    %713 = vsyncpa [#allocation5], 1
    %s714 = scalar_lea.sflag [#allocation5], 1
    %715 = vsyncpa %s714, 1

</llo_original>
